<compile_context>
chip_gen: v7x
topology: tpu7x:2x2x1
jax: 0.10.0
libtpu: 0.0.40
codegen_flags: <defaults>
</compile_context>

<pallas_src>
import functools

import jax
import jax.numpy as jnp
import numpy as np
from jax.experimental import pallas as pl
from jax.experimental.pallas import tpu as pltpu  # noqa: F401  (kept for VMEM/compiler-param tweaks)

# ----------------------------- sizes -----------------------------
N_NODES = 64          # num_nodes
X_RAW_DIM = 32        # batch.X[0] feature width
NUM_NCOLS = 8         # xsd.numeric encoder input width
NUM_OUT = 16          # xsd.numeric encoder output width
YR_NCOLS = 8          # xsd.gYear encoder input width
YR_HID = 16           # hidden width of the 2-layer temporal MLP
YR_OUT = 16           # xsd.gYear encoder output width
MOD_OUT_DIM = NUM_OUT + YR_OUT          # self.modality_out_dim
NUM_REL = 3           # num_relations
RGCN_HID = 32         # RGCN hidden width
NUM_CLASSES = 8       # RGCN output width
RGCN_DIN = X_RAW_DIM + MOD_OUT_DIM      # 64


# ------------------------- fused Pallas kernel -------------------------
def _mrgcn_fused_kernel(x_raw_ref, feat_ref, enc_w1_ref, yr_w2_ref,
                        sel_ref, a_ref, w1_ref, w2_ref, o_ref, *, n_num):
    """Entire MRGCN forward in one kernel invocation (no grid).

    All dot operands are bf16; accumulation is f32 (preferred_element_type).
    """
    f32 = jnp.float32
    bf16 = jnp.bfloat16

    def rel_agg(y_bf16, width):
        # sum_r A_r @ y[:, r*width:(r+1)*width] -- independent dots, summed once.
        terms = [jnp.dot(a_ref[r], y_bf16[:, r * width:(r + 1) * width],
                         preferred_element_type=f32)
                 for r in range(NUM_REL)]
        acc = terms[0]
        for t in terms[1:]:
            acc = acc + t
        return acc

    # ---- both encoder first layers in ONE packed dot -------------------------
    # feat = [F_numeric ; F_year] (rows), enc_w1 = [num_w*gate0 | yr_w1] (cols).
    enc = jnp.dot(feat_ref[...], enc_w1_ref[...], preferred_element_type=f32)
    out_num = enc[0:n_num, 0:NUM_OUT]                                  # (n_num, 16)
    h_yr = jnp.maximum(enc[n_num:, NUM_OUT:NUM_OUT + YR_HID], 0.0)     # (n_yr, 16)
    out_yr = jnp.dot(h_yr.astype(bf16), yr_w2_ref[...],                # gate folded in
                     preferred_element_type=f32)                        # (n_yr, 16)

    # ---- scatter encoder outputs into node rows via selection matmuls -------
    # XF[node_idx[j], :] = out[j, :] as sel @ out (sel built in the wrapper).
    sel = sel_ref[...]                                                  # (N, n_num+n_yr)
    xf_num = jnp.dot(sel[:, 0:n_num], out_num.astype(bf16),
                     preferred_element_type=f32)                        # (N, 16)
    xf_yr = jnp.dot(sel[:, n_num:], out_yr.astype(bf16),
                    preferred_element_type=f32)                         # (N, 16)

    # ---- X = cat([X_raw, XF], dim=1) as a value (no VMEM scratch slab) -------
    x = jnp.concatenate(
        [x_raw_ref[...], xf_num.astype(bf16), xf_yr.astype(bf16)], axis=-1)  # (N, 64)

    # ---- RGCN layer 1: relu(sum_r A_r @ (X @ W1_r)), weight dot first --------
    xw1 = jnp.dot(x, w1_ref[...], preferred_element_type=f32).astype(bf16)   # (N, R*32)
    h1 = jnp.maximum(rel_agg(xw1, RGCN_HID), 0.0)                            # (N, 32) f32

    # ---- RGCN layer 2: sum_r A_r @ (H1 @ W2_r) (logits) ----------------------
    hw2 = jnp.dot(h1.astype(bf16), w2_ref[...],
                  preferred_element_type=f32).astype(bf16)                   # (N, R*8)
    logits = rel_agg(hw2, NUM_CLASSES)                                       # (N, 8) f32

    o_ref[...] = logits.astype(o_ref.dtype)


def _vmem_block(shape):
    """Full-array VMEM block (no grid -> index_map takes no grid args)."""
    return pl.BlockSpec(shape, lambda *_: (0,) * len(shape))


# ------------------------- model (wrapper) -------------------------
def init_params(key):
    ks = jax.random.split(key, 6)
    sc = lambda fan_in: 1.0 / np.sqrt(fan_in)
    return {
        # xsd.numeric: 1-layer MLP
        "num_w": jax.random.normal(ks[0], (NUM_NCOLS, NUM_OUT), jnp.float32) * sc(NUM_NCOLS),
        # xsd.gYear: 2-layer MLP (Linear -> ReLU -> Linear); dropout p=0
        "yr_w1": jax.random.normal(ks[1], (YR_NCOLS, YR_HID), jnp.float32) * sc(YR_NCOLS),
        "yr_w2": jax.random.normal(ks[2], (YR_HID, YR_OUT), jnp.float32) * sc(YR_HID),
        # gate_weights = nn.Parameter(ones(num_gates) * 0.1)
        "gate": jnp.full((2,), 0.1, jnp.float32),
        # RGCN weights, one (Din, Dout) matrix per relation (num_bases=-1, bias=False)
        "rgcn_w1": jax.random.normal(ks[3], (NUM_REL, RGCN_DIN, RGCN_HID),
                                     jnp.float32) * sc(RGCN_DIN),
        "rgcn_w2": jax.random.normal(ks[4], (NUM_REL, RGCN_HID, NUM_CLASSES),
                                     jnp.float32) * sc(RGCN_HID),
    }


@jax.jit
def mrgcn_forward(params, X_raw, F_numeric, numeric_idx, F_year, year_idx, A):
    """Full-batch MRGCN forward: one fused Pallas kernel, everything VMEM-resident."""
    bf16 = jnp.bfloat16
    # TODO(synk): data-dependent skip when a gate weight is ~0 (torch.isclose)
    # is omitted; gates are 0.1 here so that branch is never taken.

    # Fold gate multipliers into the (bias-free) encoder output weights — exact.
    num_w_g = params["num_w"] * params["gate"][0]                      # (8, 16)
    yr_w2_g = params["yr_w2"] * params["gate"][1]                      # (16, 16)

    # Pack both encoder first layers: one feature stack + one weight slab.
    feat = jnp.concatenate([F_numeric, F_year], axis=0).astype(bf16)   # (96, 8)
    enc_w1 = jnp.concatenate([num_w_g, params["yr_w1"]], axis=1).astype(bf16)  # (8, 32)

    # Scatter selection matrices, built on the XLA side (off the kernel path),
    # packed into one lane-dense slab. sel[node, j] = (node == node_idx[j]).
    nodes = jnp.arange(N_NODES, dtype=jnp.int32)[:, None]
    sel_num = nodes == numeric_idx.astype(jnp.int32)[None, :]          # (64, 32)
    sel_yr = nodes == year_idx.astype(jnp.int32)[None, :]              # (64, 64)
    sel = jnp.concatenate([sel_num, sel_yr], axis=1).astype(bf16)      # (64, 96)

    # Weight-first relation packing: W_cat[k, r*Dout + d] = W_r[k, d].
    w1_cat = jnp.transpose(params["rgcn_w1"], (1, 0, 2)).reshape(
        RGCN_DIN, NUM_REL * RGCN_HID).astype(bf16)                     # (64, 96)
    w2_cat = jnp.transpose(params["rgcn_w2"], (1, 0, 2)).reshape(
        RGCN_HID, NUM_REL * NUM_CLASSES).astype(bf16)                  # (32, 24)

    args = (X_raw.astype(bf16), feat, enc_w1, yr_w2_g.astype(bf16), sel,
            A.astype(bf16), w1_cat, w2_cat)

    kernel = functools.partial(_mrgcn_fused_kernel, n_num=F_numeric.shape[0])

    return pl.pallas_call(
        kernel,
        out_shape=jax.ShapeDtypeStruct((N_NODES, NUM_CLASSES), jnp.float32),
        in_specs=[_vmem_block(a.shape) for a in args],
        out_specs=_vmem_block((N_NODES, NUM_CLASSES)),
        cost_estimate=pl.CostEstimate(flops=2_200_000, transcendentals=0,
                                      bytes_accessed=120_000),
    )(*args)


# pure-JAX f32 reference for a sanity check
def mrgcn_reference(params, X_raw, F_numeric, numeric_idx, F_year, year_idx, A):
    XF = jnp.zeros((N_NODES, MOD_OUT_DIM), jnp.float32)
    out_num = (F_numeric @ params["num_w"]) * params["gate"][0]
    XF = XF.at[numeric_idx, 0:NUM_OUT].set(out_num)
    h_yr = jnp.maximum(F_year @ params["yr_w1"], 0.0)
    out_yr = (h_yr @ params["yr_w2"]) * params["gate"][1]
    XF = XF.at[year_idx, NUM_OUT:NUM_OUT + YR_OUT].set(out_yr)
    X = jnp.concatenate([X_raw, XF], axis=1)
    H1 = jnp.maximum(jnp.einsum("rij,jd,rdk->ik", A, X, params["rgcn_w1"]), 0.0)
    H2 = jnp.einsum("rij,jd,rdk->ik", A, H1, params["rgcn_w2"])
    return H2


if __name__ == "__main__":
    key = jax.random.PRNGKey(0)
    k_par, k_x, k_num, k_yr, k_a = jax.random.split(key, 5)

    params = init_params(k_par)

    # node features (batch.X[0])
    X_raw = jax.random.normal(k_x, (N_NODES, X_RAW_DIM), jnp.float32)

    # modality encoding sets: numeric covers even nodes, gYear covers all nodes
    numeric_idx = jnp.arange(0, N_NODES, 2, dtype=jnp.int32)          # 32 nodes
    F_numeric = jax.random.normal(k_num, (numeric_idx.shape[0], NUM_NCOLS), jnp.float32)
    year_idx = jnp.arange(N_NODES, dtype=jnp.int32)
    F_year = jax.random.normal(k_yr, (N_NODES, YR_NCOLS), jnp.float32)

    # per-relation adjacency (dense, row-normalized, with self-loops)
    A = jax.random.bernoulli(k_a, 0.15, (NUM_REL, N_NODES, N_NODES)).astype(jnp.float32)
    A = A + jnp.eye(N_NODES, dtype=jnp.float32)[None]
    A = A / jnp.sum(A, axis=-1, keepdims=True)

    out = mrgcn_forward(params, X_raw, F_numeric, numeric_idx, F_year, year_idx, A)
    out = jax.block_until_ready(out)

    ref = mrgcn_reference(params, X_raw, F_numeric, numeric_idx, F_year, year_idx, A)
    # bf16 MXU operands with f32 accumulation -> loosened tolerance vs f32 reference.
    np.testing.assert_allclose(np.asarray(out), np.asarray(ref), rtol=3e-2, atol=6e-2)

    print("KERNEL_OK")
</pallas_src>

<mosaic_0001>
module attributes {stable_mosaic.version = 11 : i64} {
  func.func @_mrgcn_fused_kernel(%arg0: memref<64x32xbf16, #tpu.memory_space<vmem>>, %arg1: memref<96x8xbf16, #tpu.memory_space<vmem>>, %arg2: memref<8x32xbf16, #tpu.memory_space<vmem>>, %arg3: memref<16x16xbf16, #tpu.memory_space<vmem>>, %arg4: memref<64x96xbf16, #tpu.memory_space<vmem>>, %arg5: memref<3x64x64xbf16, #tpu.memory_space<vmem>>, %arg6: memref<64x96xbf16, #tpu.memory_space<vmem>>, %arg7: memref<32x24xbf16, #tpu.memory_space<vmem>>, %arg8: memref<64x8xf32, #tpu.memory_space<vmem>>) attributes {dimension_semantics = [], scalar_prefetch = 0 : i64, scratch_operands = 0 : i64, tpu.core_type = #tpu.core_type<tc>} {
    %c0 = arith.constant 0 : index
    %c0_0 = arith.constant 0 : index
    %0 = vector.load %arg1[%c0, %c0_0] : memref<96x8xbf16, #tpu.memory_space<vmem>>, vector<96x8xbf16>
    %c0_1 = arith.constant 0 : index
    %c0_2 = arith.constant 0 : index
    %1 = vector.load %arg2[%c0_1, %c0_2] : memref<8x32xbf16, #tpu.memory_space<vmem>>, vector<8x32xbf16>
    %cst = arith.constant dense<0.000000e+00> : vector<96x32xf32>
    %2 = tpu.matmul %0, %1, %cst {dimension_numbers = #tpu.dot_dimension_numbers<[1], [0], [0], [1], [0, 0, 1, 1], [], []>} : vector<96x8xbf16>, vector<8x32xbf16>, vector<96x32xf32> -> vector<96x32xf32>
    %3 = vector.extract_strided_slice %2 {offsets = [0, 0], sizes = [32, 16], strides = [1, 1]} : vector<96x32xf32> to vector<32x16xf32>
    %4 = vector.extract_strided_slice %2 {offsets = [32, 16], sizes = [64, 16], strides = [1, 1]} : vector<96x32xf32> to vector<64x16xf32>
    %cst_3 = arith.constant 0.000000e+00 : f32
    %5 = vector.broadcast %cst_3 : f32 to vector<64x16xf32>
    %6 = arith.maximumf %4, %5 : vector<64x16xf32>
    %7 = arith.truncf %6 : vector<64x16xf32> to vector<64x16xbf16>
    %c0_4 = arith.constant 0 : index
    %c0_5 = arith.constant 0 : index
    %8 = vector.load %arg3[%c0_4, %c0_5] : memref<16x16xbf16, #tpu.memory_space<vmem>>, vector<16x16xbf16>
    %cst_6 = arith.constant dense<0.000000e+00> : vector<64x16xf32>
    %9 = tpu.matmul %7, %8, %cst_6 {dimension_numbers = #tpu.dot_dimension_numbers<[1], [0], [0], [1], [0, 0, 1, 1], [], []>} : vector<64x16xbf16>, vector<16x16xbf16>, vector<64x16xf32> -> vector<64x16xf32>
    %c0_7 = arith.constant 0 : index
    %c0_8 = arith.constant 0 : index
    %10 = vector.load %arg4[%c0_7, %c0_8] : memref<64x96xbf16, #tpu.memory_space<vmem>>, vector<64x96xbf16>
    %11 = vector.extract_strided_slice %10 {offsets = [0, 0], sizes = [64, 32], strides = [1, 1]} : vector<64x96xbf16> to vector<64x32xbf16>
    %12 = arith.truncf %3 : vector<32x16xf32> to vector<32x16xbf16>
    %cst_9 = arith.constant dense<0.000000e+00> : vector<64x16xf32>
    %13 = tpu.matmul %11, %12, %cst_9 {dimension_numbers = #tpu.dot_dimension_numbers<[1], [0], [0], [1], [0, 0, 1, 1], [], []>} : vector<64x32xbf16>, vector<32x16xbf16>, vector<64x16xf32> -> vector<64x16xf32>
    %14 = vector.extract_strided_slice %10 {offsets = [0, 32], sizes = [64, 64], strides = [1, 1]} : vector<64x96xbf16> to vector<64x64xbf16>
    %15 = arith.truncf %9 : vector<64x16xf32> to vector<64x16xbf16>
    %cst_10 = arith.constant dense<0.000000e+00> : vector<64x16xf32>
    %16 = tpu.matmul %14, %15, %cst_10 {dimension_numbers = #tpu.dot_dimension_numbers<[1], [0], [0], [1], [0, 0, 1, 1], [], []>} : vector<64x64xbf16>, vector<64x16xbf16>, vector<64x16xf32> -> vector<64x16xf32>
    %c0_11 = arith.constant 0 : index
    %c0_12 = arith.constant 0 : index
    %17 = vector.load %arg0[%c0_11, %c0_12] : memref<64x32xbf16, #tpu.memory_space<vmem>>, vector<64x32xbf16>
    %18 = arith.truncf %13 : vector<64x16xf32> to vector<64x16xbf16>
    %19 = arith.truncf %16 : vector<64x16xf32> to vector<64x16xbf16>
    %20 = tpu.concatenate %17, %18, %19 in 1 : vector<64x32xbf16>, vector<64x16xbf16>, vector<64x16xbf16> -> vector<64x64xbf16>
    %c0_13 = arith.constant 0 : index
    %c0_14 = arith.constant 0 : index
    %21 = vector.load %arg6[%c0_13, %c0_14] : memref<64x96xbf16, #tpu.memory_space<vmem>>, vector<64x96xbf16>
    %cst_15 = arith.constant dense<0.000000e+00> : vector<64x96xf32>
    %22 = tpu.matmul %20, %21, %cst_15 {dimension_numbers = #tpu.dot_dimension_numbers<[1], [0], [0], [1], [0, 0, 1, 1], [], []>} : vector<64x64xbf16>, vector<64x96xbf16>, vector<64x96xf32> -> vector<64x96xf32>
    %23 = arith.truncf %22 : vector<64x96xf32> to vector<64x96xbf16>
    %c0_16 = arith.constant 0 : index
    %c0_17 = arith.constant 0 : index
    %c0_18 = arith.constant 0 : index
    %24 = vector.load %arg5[%c0_16, %c0_17, %c0_18] : memref<3x64x64xbf16, #tpu.memory_space<vmem>>, vector<1x64x64xbf16>
    %25 = vector.shape_cast %24 : vector<1x64x64xbf16> to vector<64x64xbf16>
    %26 = vector.extract_strided_slice %23 {offsets = [0, 0], sizes = [64, 32], strides = [1, 1]} : vector<64x96xbf16> to vector<64x32xbf16>
    %cst_19 = arith.constant dense<0.000000e+00> : vector<64x32xf32>
    %27 = tpu.matmul %25, %26, %cst_19 {dimension_numbers = #tpu.dot_dimension_numbers<[1], [0], [0], [1], [0, 0, 1, 1], [], []>} : vector<64x64xbf16>, vector<64x32xbf16>, vector<64x32xf32> -> vector<64x32xf32>
    %c1 = arith.constant 1 : index
    %c0_20 = arith.constant 0 : index
    %c0_21 = arith.constant 0 : index
    %28 = vector.load %arg5[%c1, %c0_20, %c0_21] : memref<3x64x64xbf16, #tpu.memory_space<vmem>>, vector<1x64x64xbf16>
    %29 = vector.shape_cast %28 : vector<1x64x64xbf16> to vector<64x64xbf16>
    %30 = vector.extract_strided_slice %23 {offsets = [0, 32], sizes = [64, 32], strides = [1, 1]} : vector<64x96xbf16> to vector<64x32xbf16>
    %cst_22 = arith.constant dense<0.000000e+00> : vector<64x32xf32>
    %31 = tpu.matmul %29, %30, %cst_22 {dimension_numbers = #tpu.dot_dimension_numbers<[1], [0], [0], [1], [0, 0, 1, 1], [], []>} : vector<64x64xbf16>, vector<64x32xbf16>, vector<64x32xf32> -> vector<64x32xf32>
    %c2 = arith.constant 2 : index
    %c0_23 = arith.constant 0 : index
    %c0_24 = arith.constant 0 : index
    %32 = vector.load %arg5[%c2, %c0_23, %c0_24] : memref<3x64x64xbf16, #tpu.memory_space<vmem>>, vector<1x64x64xbf16>
    %33 = vector.shape_cast %32 : vector<1x64x64xbf16> to vector<64x64xbf16>
    %34 = vector.extract_strided_slice %23 {offsets = [0, 64], sizes = [64, 32], strides = [1, 1]} : vector<64x96xbf16> to vector<64x32xbf16>
    %cst_25 = arith.constant dense<0.000000e+00> : vector<64x32xf32>
    %35 = tpu.matmul %33, %34, %cst_25 {dimension_numbers = #tpu.dot_dimension_numbers<[1], [0], [0], [1], [0, 0, 1, 1], [], []>} : vector<64x64xbf16>, vector<64x32xbf16>, vector<64x32xf32> -> vector<64x32xf32>
    %36 = arith.addf %27, %31 : vector<64x32xf32>
    %37 = arith.addf %36, %35 : vector<64x32xf32>
    %cst_26 = arith.constant 0.000000e+00 : f32
    %38 = vector.broadcast %cst_26 : f32 to vector<64x32xf32>
    %39 = arith.maximumf %37, %38 : vector<64x32xf32>
    %40 = arith.truncf %39 : vector<64x32xf32> to vector<64x32xbf16>
    %c0_27 = arith.constant 0 : index
    %c0_28 = arith.constant 0 : index
    %41 = vector.load %arg7[%c0_27, %c0_28] : memref<32x24xbf16, #tpu.memory_space<vmem>>, vector<32x24xbf16>
    %cst_29 = arith.constant dense<0.000000e+00> : vector<64x24xf32>
    %42 = tpu.matmul %40, %41, %cst_29 {dimension_numbers = #tpu.dot_dimension_numbers<[1], [0], [0], [1], [0, 0, 1, 1], [], []>} : vector<64x32xbf16>, vector<32x24xbf16>, vector<64x24xf32> -> vector<64x24xf32>
    %43 = arith.truncf %42 : vector<64x24xf32> to vector<64x24xbf16>
    %c0_30 = arith.constant 0 : index
    %c0_31 = arith.constant 0 : index
    %c0_32 = arith.constant 0 : index
    %44 = vector.load %arg5[%c0_30, %c0_31, %c0_32] : memref<3x64x64xbf16, #tpu.memory_space<vmem>>, vector<1x64x64xbf16>
    %45 = vector.shape_cast %44 : vector<1x64x64xbf16> to vector<64x64xbf16>
    %46 = vector.extract_strided_slice %43 {offsets = [0, 0], sizes = [64, 8], strides = [1, 1]} : vector<64x24xbf16> to vector<64x8xbf16>
    %cst_33 = arith.constant dense<0.000000e+00> : vector<64x8xf32>
    %47 = tpu.matmul %45, %46, %cst_33 {dimension_numbers = #tpu.dot_dimension_numbers<[1], [0], [0], [1], [0, 0, 1, 1], [], []>} : vector<64x64xbf16>, vector<64x8xbf16>, vector<64x8xf32> -> vector<64x8xf32>
    %c1_34 = arith.constant 1 : index
    %c0_35 = arith.constant 0 : index
    %c0_36 = arith.constant 0 : index
    %48 = vector.load %arg5[%c1_34, %c0_35, %c0_36] : memref<3x64x64xbf16, #tpu.memory_space<vmem>>, vector<1x64x64xbf16>
    %49 = vector.shape_cast %48 : vector<1x64x64xbf16> to vector<64x64xbf16>
    %50 = vector.extract_strided_slice %43 {offsets = [0, 8], sizes = [64, 8], strides = [1, 1]} : vector<64x24xbf16> to vector<64x8xbf16>
    %cst_37 = arith.constant dense<0.000000e+00> : vector<64x8xf32>
    %51 = tpu.matmul %49, %50, %cst_37 {dimension_numbers = #tpu.dot_dimension_numbers<[1], [0], [0], [1], [0, 0, 1, 1], [], []>} : vector<64x64xbf16>, vector<64x8xbf16>, vector<64x8xf32> -> vector<64x8xf32>
    %c2_38 = arith.constant 2 : index
    %c0_39 = arith.constant 0 : index
    %c0_40 = arith.constant 0 : index
    %52 = vector.load %arg5[%c2_38, %c0_39, %c0_40] : memref<3x64x64xbf16, #tpu.memory_space<vmem>>, vector<1x64x64xbf16>
    %53 = vector.shape_cast %52 : vector<1x64x64xbf16> to vector<64x64xbf16>
    %54 = vector.extract_strided_slice %43 {offsets = [0, 16], sizes = [64, 8], strides = [1, 1]} : vector<64x24xbf16> to vector<64x8xbf16>
    %cst_41 = arith.constant dense<0.000000e+00> : vector<64x8xf32>
    %55 = tpu.matmul %53, %54, %cst_41 {dimension_numbers = #tpu.dot_dimension_numbers<[1], [0], [0], [1], [0, 0, 1, 1], [], []>} : vector<64x64xbf16>, vector<64x8xbf16>, vector<64x8xf32> -> vector<64x8xf32>
    %56 = arith.addf %47, %51 : vector<64x8xf32>
    %57 = arith.addf %56, %55 : vector<64x8xf32>
    %c0_42 = arith.constant 0 : index
    %c0_43 = arith.constant 0 : index
    %58 = vector.load %arg8[%c0_42, %c0_43] : memref<64x8xf32, #tpu.memory_space<vmem>>, vector<64x8xf32>
    tpu.vector_store %arg8[%c0_42, %c0_43], %57 {strides = array<i32>} : memref<64x8xf32, #tpu.memory_space<vmem>>, vector<64x8xf32>,
    return
  }
}

</mosaic_0001>

<llo_original>
// kernel: mrgcn_forward.1
$region0: #{mrgcn_forward.1}
  #allocation0 [shape = 'u32[]', space=smem, size = 0x4, offset = 0x4, fixed_abs, tag = 'smem constant byte address 0x4 - core index']
  #allocation1 [shape = 'u32[144,128]{1,0:T(1,128)}', space=vmem, size = 0x12000, scoped, tag = 'internal scratch']
  %s0 = inlined_call_operand.vmem [shape: bf16[64,32], index: 0, kind: input, shape index: {}]
  %s1 = inlined_call_operand.vmem [shape: bf16[96,8], index: 1, kind: input, shape index: {}]
  %s2 = inlined_call_operand.vmem [shape: bf16[8,32], index: 2, kind: input, shape index: {}]
  %s3 = inlined_call_operand.vmem [shape: bf16[16,16], index: 3, kind: input, shape index: {}]
  %s4 = inlined_call_operand.vmem [shape: bf16[64,96], index: 4, kind: input, shape index: {}]
  %s5 = inlined_call_operand.vmem [shape: bf16[3,64,64], index: 5, kind: input, shape index: {}]
  %s6 = inlined_call_operand.vmem [shape: bf16[64,96], index: 6, kind: input, shape index: {}]
  %s7 = inlined_call_operand.vmem [shape: bf16[32,24], index: 7, kind: input, shape index: {}]
  %s8 = inlined_call_operand.vmem [shape: f32[64,8], index: 8, kind: output, shape index: {}]
  %s9 = sld [smem:[#allocation0]]
  $region42: #{mrgcn_forward.1} parent=0
    _
  %s11 = ssub.s32 1, %s9
  %s12 = scalar_select 0, %s11, %s9
  // Predicated region
  $region2: #{mrgcn_forward.1} parent=0 // pred_check
    _
  $region3: #{mrgcn_forward.1} parent=0 // pred_check_branch
    %14 = sbr.rel (0) target = $region5
  $region4: #{mrgcn_forward.1} parent=0 // pred_region
    _
  $region5: #{mrgcn_forward.1} parent=0 // pred_fallthru
    _
  // Predicated region
  $region6: #{mrgcn_forward.1} parent=0 // pred_check
    _
  $region7: #{mrgcn_forward.1} parent=0 // pred_check_branch
    %16 = sbr.rel (0) target = $region9
  $region8: #{mrgcn_forward.1} parent=0 // pred_region
    _
  $region9: #{mrgcn_forward.1} parent=0 // pred_fallthru
    _
  // Predicated region
  $region10: #{mrgcn_forward.1} parent=0 // pred_check
    _
  $region11: #{mrgcn_forward.1} parent=0 // pred_check_branch
    %18 = sbr.rel (0) target = $region13
  $region12: #{mrgcn_forward.1} parent=0 // pred_region
    _
  $region13: #{mrgcn_forward.1} parent=0 // pred_fallthru
    _
  // Predicated region
  $region14: #{mrgcn_forward.1} parent=0 // pred_check
    _
  $region15: #{mrgcn_forward.1} parent=0 // pred_check_branch
    %20 = sbr.rel (0) target = $region17
  $region16: #{mrgcn_forward.1} parent=0 // pred_region
    _
  $region17: #{mrgcn_forward.1} parent=0 // pred_fallthru
    _
  // Predicated region
  $region18: #{mrgcn_forward.1} parent=0 // pred_check
    _
  $region19: #{mrgcn_forward.1} parent=0 // pred_check_branch
    %22 = sbr.rel (0) target = $region21
  $region20: #{mrgcn_forward.1} parent=0 // pred_region
    _
  $region21: #{mrgcn_forward.1} parent=0 // pred_fallthru
    _
  // Predicated region
  $region22: #{mrgcn_forward.1} parent=0 // pred_check
    _
  $region23: #{mrgcn_forward.1} parent=0 // pred_check_branch
    %24 = sbr.rel (0) target = $region25
  $region24: #{mrgcn_forward.1} parent=0 // pred_region
    _
  $region25: #{mrgcn_forward.1} parent=0 // pred_fallthru
    _
  // Predicated region
  $region26: #{mrgcn_forward.1} parent=0 // pred_check
    _
  $region27: #{mrgcn_forward.1} parent=0 // pred_check_branch
    %26 = sbr.rel (0) target = $region29
  $region28: #{mrgcn_forward.1} parent=0 // pred_region
    _
  $region29: #{mrgcn_forward.1} parent=0 // pred_fallthru
    _
  // Predicated region
  $region30: #{mrgcn_forward.1} parent=0 // pred_check
    _
  $region31: #{mrgcn_forward.1} parent=0 // pred_check_branch
    %28 = sbr.rel (0) target = $region33
  $region32: #{mrgcn_forward.1} parent=0 // pred_region
    _
  $region33: #{mrgcn_forward.1} parent=0 // pred_fallthru
    _
  %v30 = vld [vmem:[%s1] sm:$0xf]
  %v31 = vld [vmem:[%s1 + $0x4] sm:$0xf]
  %v32 = vld [vmem:[%s1 + $0x8] sm:$0xf]
  %v33 = vld [vmem:[%s1 + $0xc] sm:$0xf]
  %v34 = vld [vmem:[%s1 + $0x10] sm:$0xf]
  %v35 = vld [vmem:[%s1 + $0x14] sm:$0xf]
  %v36 = vld [vmem:[%s1 + $0x18] sm:$0xf]
  %v37 = vld [vmem:[%s1 + $0x1c] sm:$0xf]
  %v38 = vld [vmem:[%s1 + $0x20] sm:$0xf]
  %v39 = vld [vmem:[%s1 + $0x24] sm:$0xf]
  %v40 = vld [vmem:[%s1 + $0x28] sm:$0xf]
  %v41 = vld [vmem:[%s1 + $0x2c] sm:$0xf]
  %v42 = vld [vmem:[%s2] sm:$0xf]
  %v55 = vunpack.c.l.b16 %v30
  %v56 = vunpack.c.l.b16 %v31
  %v57 = vunpack.c.l.b16 %v32
  %v58 = vunpack.c.l.b16 %v33
  %v59 = vunpack.c.l.b16 %v34
  %v60 = vunpack.c.l.b16 %v35
  %v61 = vunpack.c.l.b16 %v36
  %v62 = vunpack.c.l.b16 %v37
  %v63 = vunpack.c.l.b16 %v38
  %v64 = vunpack.c.l.b16 %v39
  %v65 = vunpack.c.l.b16 %v40
  %v66 = vunpack.c.l.b16 %v41
  %v67 = vpack.c.b16 %v56, %v55
  %v68 = vpack.c.b16 %v58, %v57
  %v69 = vpack.c.b16 %v60, %v59
  %v70 = vpack.c.b16 %v62, %v61
  %v71 = vpack.c.b16 %v64, %v63
  %v72 = vpack.c.b16 %v66, %v65
  %vm73 = vcmask 64512
  %v75 = vsel %vm73, %v67, 0
  %v78 = vsel %vm73, %v68, 0
  %v81 = vsel %vm73, %v69, 0
  %v84 = vsel %vm73, %v70, 0
  %v87 = vsel %vm73, %v71, 0
  %v90 = vsel %vm73, %v72, 0
  %vm92 = vcmask 1043456
  %v94 = vsel %vm92, %v42, 0
  %96 = vmatprep.subr.bf16.mxu0 0
  %97 = vmatpush1.bf16.msra.mxu0 %v94
  %98 = vmatprep.subr.bf16.mxu0 0
  %99 = vmatpush1.bf16.msra.mxu0 0
  %100 = vmatprep.subr.bf16.mxu0 0
  %101 = vmatpush1.bf16.msra.mxu0 0
  %102 = vmatprep.subr.bf16.mxu0 0
  %103 = vmatpush1.bf16.msra.mxu0 0
  %104 = vmatprep.subr.bf16.mxu0 0
  %105 = vmatpush1.bf16.msra.mxu0 0
  %106 = vmatprep.subr.bf16.mxu0 0
  %107 = vmatpush1.bf16.msra.mxu0 0
  %108 = vmatprep.subr.bf16.mxu0 0
  %109 = vmatpush1.bf16.msra.mxu0 0
  %110 = vmatprep.subr.bf16.mxu0 0
  %111 = vmatpush1.bf16.msra.mxu0 0
  %112 = vmatprep.subr.bf16.mxu0 0
  %113 = vmatpush1.bf16.msra.mxu0 0
  %114 = vmatprep.subr.bf16.mxu0 0
  %115 = vmatpush1.bf16.msra.mxu0 0
  %116 = vmatprep.subr.bf16.mxu0 0
  %117 = vmatpush1.bf16.msra.mxu0 0
  %118 = vmatprep.subr.bf16.mxu0 0
  %119 = vmatpush1.bf16.msra.mxu0 0
  %120 = vmatprep.subr.bf16.mxu0 0
  %121 = vmatpush1.bf16.msra.mxu0 0
  %122 = vmatprep.subr.bf16.mxu0 0
  %123 = vmatpush1.bf16.msra.mxu0 0
  %124 = vmatprep.subr.bf16.mxu0 0
  %125 = vmatpush1.bf16.msra.mxu0 0
  %126 = vmatprep.subr.bf16.mxu0 0
  %127 = vmatpush1.bf16.msra.mxu0 0
  %128 = vmatprep.mubr.bf16.mxu0 0
  %129 = vmatmul.mubr.bf16.gmra.mrb[0].mxu0 %v75
  %v130 = vpop.f32.mrb[0].mxu0
  %v131 = vadd.f32 0.0, %v130
  %v132 = vpop.f32.mrb[0].mxu0
  %v133 = vpop.f32.mrb[0].mxu0
  %v134 = vadd.f32 0.0, %v133
  %v135 = vpop.f32.mrb[0].mxu0
  %136 = vmatprep.mubr.bf16.mxu0 0
  %137 = vmatmul.mubr.bf16.gmra.mrb[0].mxu0 %v78
  %v138 = vpop.f32.mrb[0].mxu0
  %v139 = vadd.f32 0.0, %v138
  %v140 = vpop.f32.mrb[0].mxu0
  %v141 = vpop.f32.mrb[0].mxu0
  %v142 = vadd.f32 0.0, %v141
  %v143 = vpop.f32.mrb[0].mxu0
  %144 = vmatprep.mubr.bf16.mxu0 0
  %145 = vmatmul.mubr.bf16.gmra.mrb[0].mxu0 %v81
  %v146 = vpop.f32.mrb[0].mxu0
  %v147 = vadd.f32 0.0, %v146
  %v148 = vpop.f32.mrb[0].mxu0
  %v149 = vpop.f32.mrb[0].mxu0
  %v150 = vadd.f32 0.0, %v149
  %v151 = vpop.f32.mrb[0].mxu0
  %152 = vmatprep.mubr.bf16.mxu0 0
  %153 = vmatmul.mubr.bf16.gmra.mrb[0].mxu0 %v84
  %v154 = vpop.f32.mrb[0].mxu0
  %v155 = vadd.f32 0.0, %v154
  %v156 = vpop.f32.mrb[0].mxu0
  %v157 = vpop.f32.mrb[0].mxu0
  %v158 = vadd.f32 0.0, %v157
  %v159 = vpop.f32.mrb[0].mxu0
  %160 = vmatprep.mubr.bf16.mxu0 0
  %161 = vmatmul.mubr.bf16.gmra.mrb[0].mxu0 %v87
  %v162 = vpop.f32.mrb[0].mxu0
  %v163 = vadd.f32 0.0, %v162
  %v164 = vpop.f32.mrb[0].mxu0
  %v165 = vpop.f32.mrb[0].mxu0
  %v166 = vadd.f32 0.0, %v165
  %v167 = vpop.f32.mrb[0].mxu0
  %168 = vmatprep.mubr.bf16.mxu0 0
  %169 = vmatmul.mubr.bf16.gmra.mrb[0].mxu0 %v90
  %v170 = vpop.f32.mrb[0].mxu0
  %v171 = vadd.f32 0.0, %v170
  %v172 = vpop.f32.mrb[0].mxu0
  %v173 = vpop.f32.mrb[0].mxu0
  %v174 = vadd.f32 0.0, %v173
  %v175 = vpop.f32.mrb[0].mxu0
  %176 = vdwg.mxu0
  %v177 = vmax.f32 %v147, 0.0
  %v178 = vmax.f32 %v150, 0.0
  %v179 = vmax.f32 %v155, 0.0
  %v180 = vmax.f32 %v158, 0.0
  %v181 = vmax.f32 %v163, 0.0
  %v182 = vmax.f32 %v166, 0.0
  %v183 = vmax.f32 %v171, 0.0
  %v184 = vmax.f32 %v174, 0.0
  %v185 = vpack.c.bf16 %v178, %v177
  %v186 = vpack.c.bf16 %v180, %v179
  %v187 = vpack.c.bf16 %v182, %v181
  %v188 = vpack.c.bf16 %v184, %v183
  %v189 = vld [vmem:[%s3] sm:$0xf]
  %v190 = vld [vmem:[%s3 + $0x4] sm:$0xf]
  %195 = vrot.lane.b32.xlu0 %v185, 112
  %v196 = vpop.permute.xlu0 %195
  %197 = vrot.lane.b32.xlu0 %v186, 112
  %v198 = vpop.permute.xlu0 %197
  %199 = vrot.lane.b32.xlu0 %v187, 112
  %v200 = vpop.permute.xlu0 %199
  %201 = vrot.lane.b32.xlu0 %v188, 112
  %v202 = vpop.permute.xlu0 %201
  %v205 = vunpack.c.l.b16 %v189
  %v206 = vunpack.c.l.b16 %v190
  %v207 = vpack.c.b16 %v206, %v205
  %vm209 = vcmask 130048
  %v211 = vsel %vm209, %v196, 0
  %v214 = vsel %vm209, %v198, 0
  %v217 = vsel %vm209, %v200, 0
  %v220 = vsel %vm209, %v202, 0
  %222 = vmatprep.subr.bf16.mxu0 0
  %223 = vmatpush1.bf16.msra.mxu0 %v207
  %224 = vmatprep.subr.bf16.mxu0 0
  %225 = vmatpush1.bf16.msra.mxu0 0
  %226 = vmatprep.subr.bf16.mxu0 0
  %227 = vmatpush1.bf16.msra.mxu0 0
  %228 = vmatprep.subr.bf16.mxu0 0
  %229 = vmatpush1.bf16.msra.mxu0 0
  %230 = vmatprep.subr.bf16.mxu0 0
  %231 = vmatpush1.bf16.msra.mxu0 0
  %232 = vmatprep.subr.bf16.mxu0 0
  %233 = vmatpush1.bf16.msra.mxu0 0
  %234 = vmatprep.subr.bf16.mxu0 0
  %235 = vmatpush1.bf16.msra.mxu0 0
  %236 = vmatprep.subr.bf16.mxu0 0
  %237 = vmatpush1.bf16.msra.mxu0 0
  %238 = vmatprep.subr.bf16.mxu0 0
  %239 = vmatpush1.bf16.msra.mxu0 0
  %240 = vmatprep.subr.bf16.mxu0 0
  %241 = vmatpush1.bf16.msra.mxu0 0
  %242 = vmatprep.subr.bf16.mxu0 0
  %243 = vmatpush1.bf16.msra.mxu0 0
  %244 = vmatprep.subr.bf16.mxu0 0
  %245 = vmatpush1.bf16.msra.mxu0 0
  %246 = vmatprep.subr.bf16.mxu0 0
  %247 = vmatpush1.bf16.msra.mxu0 0
  %248 = vmatprep.subr.bf16.mxu0 0
  %249 = vmatpush1.bf16.msra.mxu0 0
  %250 = vmatprep.subr.bf16.mxu0 0
  %251 = vmatpush1.bf16.msra.mxu0 0
  %252 = vmatprep.subr.bf16.mxu0 0
  %253 = vmatpush1.bf16.msra.mxu0 0
  %254 = vmatprep.mubr.bf16.mxu0 0
  %255 = vmatmul.mubr.bf16.gmra.mrb[0].mxu0 %v211
  %v256 = vpop.f32.mrb[0].mxu0
  %v257 = vadd.f32 0.0, %v256
  %v258 = vpop.f32.mrb[0].mxu0
  %v259 = vpop.f32.mrb[0].mxu0
  %v260 = vadd.f32 0.0, %v259
  %v261 = vpop.f32.mrb[0].mxu0
  %262 = vmatprep.mubr.bf16.mxu0 0
  %263 = vmatmul.mubr.bf16.gmra.mrb[0].mxu0 %v214
  %v264 = vpop.f32.mrb[0].mxu0
  %v265 = vadd.f32 0.0, %v264
  %v266 = vpop.f32.mrb[0].mxu0
  %v267 = vpop.f32.mrb[0].mxu0
  %v268 = vadd.f32 0.0, %v267
  %v269 = vpop.f32.mrb[0].mxu0
  %270 = vmatprep.mubr.bf16.mxu0 0
  %271 = vmatmul.mubr.bf16.gmra.mrb[0].mxu0 %v217
  %v272 = vpop.f32.mrb[0].mxu0
  %v273 = vadd.f32 0.0, %v272
  %v274 = vpop.f32.mrb[0].mxu0
  %v275 = vpop.f32.mrb[0].mxu0
  %v276 = vadd.f32 0.0, %v275
  %v277 = vpop.f32.mrb[0].mxu0
  %278 = vmatprep.mubr.bf16.mxu0 0
  %279 = vmatmul.mubr.bf16.gmra.mrb[0].mxu0 %v220
  %v280 = vpop.f32.mrb[0].mxu0
  %v281 = vadd.f32 0.0, %v280
  %v282 = vpop.f32.mrb[0].mxu0
  %v283 = vpop.f32.mrb[0].mxu0
  %v284 = vadd.f32 0.0, %v283
  %v285 = vpop.f32.mrb[0].mxu0
  %286 = vdwg.mxu0
  %v287 = vld [vmem:[%s4] sm:$0xf]
  %v288 = vld [vmem:[%s4 + $0x4] sm:$0xf]
  %v289 = vld [vmem:[%s4 + $0x8] sm:$0xf]
  %v290 = vld [vmem:[%s4 + $0xc] sm:$0xf]
  %v291 = vld [vmem:[%s4 + $0x10] sm:$0xf]
  %v292 = vld [vmem:[%s4 + $0x14] sm:$0xf]
  %v293 = vld [vmem:[%s4 + $0x18] sm:$0xf]
  %v294 = vld [vmem:[%s4 + $0x1c] sm:$0xf]
  %v295 = vpack.c.bf16 %v134, %v131
  %v296 = vpack.c.bf16 %v142, %v139
  %v305 = vunpack.c.l.b16 %v287
  %v306 = vunpack.c.l.b16 %v288
  %v307 = vunpack.c.l.b16 %v289
  %v308 = vunpack.c.l.b16 %v290
  %v309 = vunpack.c.l.b16 %v291
  %v310 = vunpack.c.l.b16 %v292
  %v311 = vunpack.c.l.b16 %v293
  %v312 = vunpack.c.l.b16 %v294
  %v313 = vpack.c.b16 %v306, %v305
  %v314 = vpack.c.b16 %v308, %v307
  %v315 = vpack.c.b16 %v310, %v309
  %v316 = vpack.c.b16 %v312, %v311
  %vm317 = vcmask 261120
  %v319 = vsel %vm317, %v313, 0
  %v322 = vsel %vm317, %v314, 0
  %v325 = vsel %vm317, %v315, 0
  %v328 = vsel %vm317, %v316, 0
  %330 = vmatprep.subr.bf16.mxu0 0
  %331 = vmatpush1.bf16.msra.mxu0 %v295
  %332 = vmatprep.subr.bf16.mxu0 0
  %333 = vmatpush1.bf16.msra.mxu0 %v296
  %334 = vmatprep.subr.bf16.mxu0 0
  %335 = vmatpush1.bf16.msra.mxu0 0
  %336 = vmatprep.subr.bf16.mxu0 0
  %337 = vmatpush1.bf16.msra.mxu0 0
  %338 = vmatprep.subr.bf16.mxu0 0
  %339 = vmatpush1.bf16.msra.mxu0 0
  %340 = vmatprep.subr.bf16.mxu0 0
  %341 = vmatpush1.bf16.msra.mxu0 0
  %342 = vmatprep.subr.bf16.mxu0 0
  %343 = vmatpush1.bf16.msra.mxu0 0
  %344 = vmatprep.subr.bf16.mxu0 0
  %345 = vmatpush1.bf16.msra.mxu0 0
  %346 = vmatprep.subr.bf16.mxu0 0
  %347 = vmatpush1.bf16.msra.mxu0 0
  %348 = vmatprep.subr.bf16.mxu0 0
  %349 = vmatpush1.bf16.msra.mxu0 0
  %350 = vmatprep.subr.bf16.mxu0 0
  %351 = vmatpush1.bf16.msra.mxu0 0
  %352 = vmatprep.subr.bf16.mxu0 0
  %353 = vmatpush1.bf16.msra.mxu0 0
  %354 = vmatprep.subr.bf16.mxu0 0
  %355 = vmatpush1.bf16.msra.mxu0 0
  %356 = vmatprep.subr.bf16.mxu0 0
  %357 = vmatpush1.bf16.msra.mxu0 0
  %358 = vmatprep.subr.bf16.mxu0 0
  %359 = vmatpush1.bf16.msra.mxu0 0
  %360 = vmatprep.subr.bf16.mxu0 0
  %361 = vmatpush1.bf16.msra.mxu0 0
  %362 = vmatprep.mubr.bf16.mxu0 0
  %363 = vmatmul.mubr.bf16.gmra.mrb[0].mxu0 %v319
  %v364 = vpop.f32.mrb[0].mxu0
  %v365 = vadd.f32 0.0, %v364
  %v366 = vpop.f32.mrb[0].mxu0
  %v367 = vpop.f32.mrb[0].mxu0
  %v368 = vadd.f32 0.0, %v367
  %v369 = vpop.f32.mrb[0].mxu0
  %370 = vmatprep.mubr.bf16.mxu0 0
  %371 = vmatmul.mubr.bf16.gmra.mrb[0].mxu0 %v322
  %v372 = vpop.f32.mrb[0].mxu0
  %v373 = vadd.f32 0.0, %v372
  %v374 = vpop.f32.mrb[0].mxu0
  %v375 = vpop.f32.mrb[0].mxu0
  %v376 = vadd.f32 0.0, %v375
  %v377 = vpop.f32.mrb[0].mxu0
  %378 = vmatprep.mubr.bf16.mxu0 0
  %379 = vmatmul.mubr.bf16.gmra.mrb[0].mxu0 %v325
  %v380 = vpop.f32.mrb[0].mxu0
  %v381 = vadd.f32 0.0, %v380
  %v382 = vpop.f32.mrb[0].mxu0
  %v383 = vpop.f32.mrb[0].mxu0
  %v384 = vadd.f32 0.0, %v383
  %v385 = vpop.f32.mrb[0].mxu0
  %386 = vmatprep.mubr.bf16.mxu0 0
  %387 = vmatmul.mubr.bf16.gmra.mrb[0].mxu0 %v328
  %v388 = vpop.f32.mrb[0].mxu0
  %v389 = vadd.f32 0.0, %v388
  %v390 = vpop.f32.mrb[0].mxu0
  %v391 = vpop.f32.mrb[0].mxu0
  %v392 = vadd.f32 0.0, %v391
  %v393 = vpop.f32.mrb[0].mxu0
  %394 = vdwg.mxu0
  %v395 = vpack.c.bf16 %v260, %v257
  %v396 = vpack.c.bf16 %v268, %v265
  %v397 = vpack.c.bf16 %v276, %v273
  %v398 = vpack.c.bf16 %v284, %v281
  %399 = vrot.lane.b32.xlu0 %v313, 96
  %v400 = vpop.permute.xlu0 %399
  %401 = vrot.lane.b32.xlu0 %v314, 96
  %v402 = vpop.permute.xlu0 %401
  %403 = vrot.lane.b32.xlu0 %v315, 96
  %v404 = vpop.permute.xlu0 %403
  %405 = vrot.lane.b32.xlu0 %v316, 96
  %v406 = vpop.permute.xlu0 %405
  %vm407 = vcmask 523264
  %v409 = vsel %vm407, %v400, 0
  %v412 = vsel %vm407, %v402, 0
  %v415 = vsel %vm407, %v404, 0
  %v418 = vsel %vm407, %v406, 0
  %420 = vmatprep.subr.bf16.mxu0 0
  %421 = vmatpush1.bf16.msra.mxu0 %v395
  %422 = vmatprep.subr.bf16.mxu0 0
  %423 = vmatpush1.bf16.msra.mxu0 %v396
  %424 = vmatprep.subr.bf16.mxu0 0
  %425 = vmatpush1.bf16.msra.mxu0 %v397
  %426 = vmatprep.subr.bf16.mxu0 0
  %427 = vmatpush1.bf16.msra.mxu0 %v398
  %428 = vmatprep.subr.bf16.mxu0 0
  %429 = vmatpush1.bf16.msra.mxu0 0
  %430 = vmatprep.subr.bf16.mxu0 0
  %431 = vmatpush1.bf16.msra.mxu0 0
  %432 = vmatprep.subr.bf16.mxu0 0
  %433 = vmatpush1.bf16.msra.mxu0 0
  %434 = vmatprep.subr.bf16.mxu0 0
  %435 = vmatpush1.bf16.msra.mxu0 0
  %436 = vmatprep.subr.bf16.mxu0 0
  %437 = vmatpush1.bf16.msra.mxu0 0
  %438 = vmatprep.subr.bf16.mxu0 0
  %439 = vmatpush1.bf16.msra.mxu0 0
  %440 = vmatprep.subr.bf16.mxu0 0
  %441 = vmatpush1.bf16.msra.mxu0 0
  %442 = vmatprep.subr.bf16.mxu0 0
  %443 = vmatpush1.bf16.msra.mxu0 0
  %444 = vmatprep.subr.bf16.mxu0 0
  %445 = vmatpush1.bf16.msra.mxu0 0
  %446 = vmatprep.subr.bf16.mxu0 0
  %447 = vmatpush1.bf16.msra.mxu0 0
  %448 = vmatprep.subr.bf16.mxu0 0
  %449 = vmatpush1.bf16.msra.mxu0 0
  %450 = vmatprep.subr.bf16.mxu0 0
  %451 = vmatpush1.bf16.msra.mxu0 0
  %452 = vmatprep.mubr.bf16.mxu0 0
  %453 = vmatmul.mubr.bf16.gmra.mrb[0].mxu0 %v409
  %v454 = vpop.f32.mrb[0].mxu0
  %v455 = vadd.f32 0.0, %v454
  %v456 = vpop.f32.mrb[0].mxu0
  %v457 = vpop.f32.mrb[0].mxu0
  %v458 = vadd.f32 0.0, %v457
  %v459 = vpop.f32.mrb[0].mxu0
  %460 = vmatprep.mubr.bf16.mxu0 0
  %461 = vmatmul.mubr.bf16.gmra.mrb[0].mxu0 %v412
  %v462 = vpop.f32.mrb[0].mxu0
  %v463 = vadd.f32 0.0, %v462
  %v464 = vpop.f32.mrb[0].mxu0
  %v465 = vpop.f32.mrb[0].mxu0
  %v466 = vadd.f32 0.0, %v465
  %v467 = vpop.f32.mrb[0].mxu0
  %468 = vmatprep.mubr.bf16.mxu0 0
  %469 = vmatmul.mubr.bf16.gmra.mrb[0].mxu0 %v415
  %v470 = vpop.f32.mrb[0].mxu0
  %v471 = vadd.f32 0.0, %v470
  %v472 = vpop.f32.mrb[0].mxu0
  %v473 = vpop.f32.mrb[0].mxu0
  %v474 = vadd.f32 0.0, %v473
  %v475 = vpop.f32.mrb[0].mxu0
  %476 = vmatprep.mubr.bf16.mxu0 0
  %477 = vmatmul.mubr.bf16.gmra.mrb[0].mxu0 %v418
  %v478 = vpop.f32.mrb[0].mxu0
  %v479 = vadd.f32 0.0, %v478
  %v480 = vpop.f32.mrb[0].mxu0
  %v481 = vpop.f32.mrb[0].mxu0
  %v482 = vadd.f32 0.0, %v481
  %v483 = vpop.f32.mrb[0].mxu0
  %484 = vdwg.mxu0
  %v485 = vld [vmem:[%s0] sm:$0xf]
  %v486 = vld [vmem:[%s0 + $0x4] sm:$0xf]
  %v487 = vld [vmem:[%s0 + $0x8] sm:$0xf]
  %v488 = vld [vmem:[%s0 + $0xc] sm:$0xf]
  %v489 = vld [vmem:[%s0 + $0x10] sm:$0xf]
  %v490 = vld [vmem:[%s0 + $0x14] sm:$0xf]
  %v491 = vld [vmem:[%s0 + $0x18] sm:$0xf]
  %v492 = vld [vmem:[%s0 + $0x1c] sm:$0xf]
  %v493 = vpack.c.bf16 %v368, %v365
  %v494 = vpack.c.bf16 %v376, %v373
  %v495 = vpack.c.bf16 %v384, %v381
  %v496 = vpack.c.bf16 %v392, %v389
  %v497 = vpack.c.bf16 %v458, %v455
  %v498 = vpack.c.bf16 %v466, %v463
  %v499 = vpack.c.bf16 %v474, %v471
  %v500 = vpack.c.bf16 %v482, %v479
  %v509 = vunpack.c.l.b16 %v485
  %v510 = vunpack.c.l.b16 %v486
  %v511 = vunpack.c.l.b16 %v487
  %v512 = vunpack.c.l.b16 %v488
  %v513 = vunpack.c.l.b16 %v489
  %v514 = vunpack.c.l.b16 %v490
  %v515 = vunpack.c.l.b16 %v491
  %v516 = vunpack.c.l.b16 %v492
  %v517 = vpack.c.b16 %v510, %v509
  %v518 = vpack.c.b16 %v512, %v511
  %v519 = vpack.c.b16 %v514, %v513
  %v520 = vpack.c.b16 %v516, %v515
  %525 = vrot.lane.b32.xlu0 %v493, 32
  %v526 = vpop.permute.xlu0 %525
  %527 = vrot.lane.b32.xlu0 %v494, 32
  %v528 = vpop.permute.xlu0 %527
  %529 = vrot.lane.b32.xlu0 %v495, 32
  %v530 = vpop.permute.xlu0 %529
  %531 = vrot.lane.b32.xlu0 %v496, 32
  %v532 = vpop.permute.xlu0 %531
  %537 = vrot.lane.b32.xlu0 %v497, 48
  %v538 = vpop.permute.xlu0 %537
  %539 = vrot.lane.b32.xlu0 %v498, 48
  %v540 = vpop.permute.xlu0 %539
  %541 = vrot.lane.b32.xlu0 %v499, 48
  %v542 = vpop.permute.xlu0 %541
  %543 = vrot.lane.b32.xlu0 %v500, 48
  %v544 = vpop.permute.xlu0 %543
  %v547 = vsel %vm317, %v517, %v526
  %v550 = vsel %vm317, %v518, %v528
  %v553 = vsel %vm317, %v519, %v530
  %v556 = vsel %vm317, %v520, %v532
  %vm557 = vcmask 392192
  %v559 = vsel %vm557, %v547, %v538
  %v561 = vsel %vm557, %v550, %v540
  %v563 = vsel %vm557, %v553, %v542
  %v565 = vsel %vm557, %v556, %v544
  %v566 = vld [vmem:[%s6] sm:$0xf]
  %v567 = vld [vmem:[%s6 + $0x4] sm:$0xf]
  %v568 = vld [vmem:[%s6 + $0x8] sm:$0xf]
  %v569 = vld [vmem:[%s6 + $0xc] sm:$0xf]
  %v570 = vld [vmem:[%s6 + $0x10] sm:$0xf]
  %v571 = vld [vmem:[%s6 + $0x14] sm:$0xf]
  %v572 = vld [vmem:[%s6 + $0x18] sm:$0xf]
  %v573 = vld [vmem:[%s6 + $0x1c] sm:$0xf]
  %v582 = vunpack.c.l.b16 %v566
  %v583 = vunpack.c.l.b16 %v567
  %v584 = vunpack.c.l.b16 %v568
  %v585 = vunpack.c.l.b16 %v569
  %v586 = vunpack.c.l.b16 %v570
  %v587 = vunpack.c.l.b16 %v571
  %v588 = vunpack.c.l.b16 %v572
  %v589 = vunpack.c.l.b16 %v573
  %v590 = vpack.c.b16 %v583, %v582
  %v591 = vpack.c.b16 %v585, %v584
  %v592 = vpack.c.b16 %v587, %v586
  %v593 = vpack.c.b16 %v589, %v588
  %v598 = vsel %vm407, %v559, 0
  %v600 = vsel %vm407, %v561, 0
  %v602 = vsel %vm407, %v563, 0
  %v604 = vsel %vm407, %v565, 0
  %606 = vmatprep.subr.bf16.mxu0 0
  %607 = vmatpush1.bf16.msra.mxu0 %v590
  %608 = vmatprep.subr.bf16.mxu0 0
  %609 = vmatpush1.bf16.msra.mxu0 %v591
  %610 = vmatprep.subr.bf16.mxu0 0
  %611 = vmatpush1.bf16.msra.mxu0 %v592
  %612 = vmatprep.subr.bf16.mxu0 0
  %613 = vmatpush1.bf16.msra.mxu0 %v593
  %614 = vmatprep.subr.bf16.mxu0 0
  %615 = vmatpush1.bf16.msra.mxu0 0
  %616 = vmatprep.subr.bf16.mxu0 0
  %617 = vmatpush1.bf16.msra.mxu0 0
  %618 = vmatprep.subr.bf16.mxu0 0
  %619 = vmatpush1.bf16.msra.mxu0 0
  %620 = vmatprep.subr.bf16.mxu0 0
  %621 = vmatpush1.bf16.msra.mxu0 0
  %622 = vmatprep.subr.bf16.mxu0 0
  %623 = vmatpush1.bf16.msra.mxu0 0
  %624 = vmatprep.subr.bf16.mxu0 0
  %625 = vmatpush1.bf16.msra.mxu0 0
  %626 = vmatprep.subr.bf16.mxu0 0
  %627 = vmatpush1.bf16.msra.mxu0 0
  %628 = vmatprep.subr.bf16.mxu0 0
  %629 = vmatpush1.bf16.msra.mxu0 0
  %630 = vmatprep.subr.bf16.mxu0 0
  %631 = vmatpush1.bf16.msra.mxu0 0
  %632 = vmatprep.subr.bf16.mxu0 0
  %633 = vmatpush1.bf16.msra.mxu0 0
  %634 = vmatprep.subr.bf16.mxu0 0
  %635 = vmatpush1.bf16.msra.mxu0 0
  %636 = vmatprep.subr.bf16.mxu0 0
  %637 = vmatpush1.bf16.msra.mxu0 0
  %638 = vmatprep.mubr.bf16.mxu0 0
  %639 = vmatmul.mubr.bf16.gmra.mrb[0].mxu0 %v598
  %v640 = vpop.f32.mrb[0].mxu0
  %v641 = vadd.f32 0.0, %v640
  %v642 = vpop.f32.mrb[0].mxu0
  %v643 = vpop.f32.mrb[0].mxu0
  %v644 = vadd.f32 0.0, %v643
  %v645 = vpop.f32.mrb[0].mxu0
  %646 = vmatprep.mubr.bf16.mxu0 0
  %647 = vmatmul.mubr.bf16.gmra.mrb[0].mxu0 %v600
  %v648 = vpop.f32.mrb[0].mxu0
  %v649 = vadd.f32 0.0, %v648
  %v650 = vpop.f32.mrb[0].mxu0
  %v651 = vpop.f32.mrb[0].mxu0
  %v652 = vadd.f32 0.0, %v651
  %v653 = vpop.f32.mrb[0].mxu0
  %654 = vmatprep.mubr.bf16.mxu0 0
  %655 = vmatmul.mubr.bf16.gmra.mrb[0].mxu0 %v602
  %v656 = vpop.f32.mrb[0].mxu0
  %v657 = vadd.f32 0.0, %v656
  %v658 = vpop.f32.mrb[0].mxu0
  %v659 = vpop.f32.mrb[0].mxu0
  %v660 = vadd.f32 0.0, %v659
  %v661 = vpop.f32.mrb[0].mxu0
  %662 = vmatprep.mubr.bf16.mxu0 0
  %663 = vmatmul.mubr.bf16.gmra.mrb[0].mxu0 %v604
  %v664 = vpop.f32.mrb[0].mxu0
  %v665 = vadd.f32 0.0, %v664
  %v666 = vpop.f32.mrb[0].mxu0
  %v667 = vpop.f32.mrb[0].mxu0
  %v668 = vadd.f32 0.0, %v667
  %v669 = vpop.f32.mrb[0].mxu0
  %670 = vdwg.mxu0
  %v671 = vpack.c.bf16 %v644, %v641
  %v672 = vpack.c.bf16 %v652, %v649
  %v673 = vpack.c.bf16 %v660, %v657
  %v674 = vpack.c.bf16 %v668, %v665
  %v675 = vld [vmem:[%s5] sm:$0xf]
  %v676 = vld [vmem:[%s5 + $0x4] sm:$0xf]
  %v677 = vld [vmem:[%s5 + $0x8] sm:$0xf]
  %v678 = vld [vmem:[%s5 + $0xc] sm:$0xf]
  %v679 = vld [vmem:[%s5 + $0x10] sm:$0xf]
  %v680 = vld [vmem:[%s5 + $0x14] sm:$0xf]
  %v681 = vld [vmem:[%s5 + $0x18] sm:$0xf]
  %v682 = vld [vmem:[%s5 + $0x1c] sm:$0xf]
  %s683 = scalar_lea.vmem %s5, 32
  %v684 = vld [vmem:[%s683] sm:$0xf]
  %v685 = vld [vmem:[%s683 + $0x4] sm:$0xf]
  %v686 = vld [vmem:[%s683 + $0x8] sm:$0xf]
  %v687 = vld [vmem:[%s683 + $0xc] sm:$0xf]
  %v688 = vld [vmem:[%s683 + $0x10] sm:$0xf]
  %v689 = vld [vmem:[%s683 + $0x14] sm:$0xf]
  %v690 = vld [vmem:[%s683 + $0x18] sm:$0xf]
  %v691 = vld [vmem:[%s683 + $0x1c] sm:$0xf]
  %v700 = vunpack.c.l.b16 %v684
  %v701 = vunpack.c.l.b16 %v685
  %v702 = vunpack.c.l.b16 %v686
  %v703 = vunpack.c.l.b16 %v687
  %v704 = vunpack.c.l.b16 %v688
  %v705 = vunpack.c.l.b16 %v689
  %v706 = vunpack.c.l.b16 %v690
  %v707 = vunpack.c.l.b16 %v691
  %v708 = vpack.c.b16 %v701, %v700
  %v709 = vpack.c.b16 %v703, %v702
  %v710 = vpack.c.b16 %v705, %v704
  %v711 = vpack.c.b16 %v707, %v706
  %716 = vrot.lane.b32.xlu0 %v671, 96
  %v717 = vpop.permute.xlu0 %716
  %718 = vrot.lane.b32.xlu0 %v672, 96
  %v719 = vpop.permute.xlu0 %718
  %720 = vrot.lane.b32.xlu0 %v673, 96
  %v721 = vpop.permute.xlu0 %720
  %722 = vrot.lane.b32.xlu0 %v674, 96
  %v723 = vpop.permute.xlu0 %722
  %v729 = vsel %vm407, %v708, 0
  %v732 = vsel %vm407, %v709, 0
  %v735 = vsel %vm407, %v710, 0
  %v738 = vsel %vm407, %v711, 0
  %740 = vmatprep.subr.bf16.mxu0 0
  %741 = vmatpush1.bf16.msra.mxu0 %v717
  %742 = vmatprep.subr.bf16.mxu0 0
  %743 = vmatpush1.bf16.msra.mxu0 %v719
  %744 = vmatprep.subr.bf16.mxu0 0
  %745 = vmatpush1.bf16.msra.mxu0 %v721
  %746 = vmatprep.subr.bf16.mxu0 0
  %747 = vmatpush1.bf16.msra.mxu0 %v723
  %748 = vmatprep.subr.bf16.mxu0 0
  %749 = vmatpush1.bf16.msra.mxu0 0
  %750 = vmatprep.subr.bf16.mxu0 0
  %751 = vmatpush1.bf16.msra.mxu0 0
  %752 = vmatprep.subr.bf16.mxu0 0
  %753 = vmatpush1.bf16.msra.mxu0 0
  %754 = vmatprep.subr.bf16.mxu0 0
  %755 = vmatpush1.bf16.msra.mxu0 0
  %756 = vmatprep.subr.bf16.mxu0 0
  %757 = vmatpush1.bf16.msra.mxu0 0
  %758 = vmatprep.subr.bf16.mxu0 0
  %759 = vmatpush1.bf16.msra.mxu0 0
  %760 = vmatprep.subr.bf16.mxu0 0
  %761 = vmatpush1.bf16.msra.mxu0 0
  %762 = vmatprep.subr.bf16.mxu0 0
  %763 = vmatpush1.bf16.msra.mxu0 0
  %764 = vmatprep.subr.bf16.mxu0 0
  %765 = vmatpush1.bf16.msra.mxu0 0
  %766 = vmatprep.subr.bf16.mxu0 0
  %767 = vmatpush1.bf16.msra.mxu0 0
  %768 = vmatprep.subr.bf16.mxu0 0
  %769 = vmatpush1.bf16.msra.mxu0 0
  %770 = vmatprep.subr.bf16.mxu0 0
  %771 = vmatpush1.bf16.msra.mxu0 0
  %772 = vmatprep.mubr.bf16.mxu0 0
  %773 = vmatmul.mubr.bf16.gmra.mrb[0].mxu0 %v729
  %v774 = vpop.f32.mrb[0].mxu0
  %v775 = vadd.f32 0.0, %v774
  %v776 = vpop.f32.mrb[0].mxu0
  %v777 = vpop.f32.mrb[0].mxu0
  %v778 = vadd.f32 0.0, %v777
  %v779 = vpop.f32.mrb[0].mxu0
  %780 = vmatprep.mubr.bf16.mxu0 0
  %781 = vmatmul.mubr.bf16.gmra.mrb[0].mxu0 %v732
  %v782 = vpop.f32.mrb[0].mxu0
  %v783 = vadd.f32 0.0, %v782
  %v784 = vpop.f32.mrb[0].mxu0
  %v785 = vpop.f32.mrb[0].mxu0
  %v786 = vadd.f32 0.0, %v785
  %v787 = vpop.f32.mrb[0].mxu0
  %788 = vmatprep.mubr.bf16.mxu0 0
  %789 = vmatmul.mubr.bf16.gmra.mrb[0].mxu0 %v735
  %v790 = vpop.f32.mrb[0].mxu0
  %v791 = vadd.f32 0.0, %v790
  %v792 = vpop.f32.mrb[0].mxu0
  %v793 = vpop.f32.mrb[0].mxu0
  %v794 = vadd.f32 0.0, %v793
  %v795 = vpop.f32.mrb[0].mxu0
  %796 = vmatprep.mubr.bf16.mxu0 0
  %797 = vmatmul.mubr.bf16.gmra.mrb[0].mxu0 %v738
  %v798 = vpop.f32.mrb[0].mxu0
  %v799 = vadd.f32 0.0, %v798
  %v800 = vpop.f32.mrb[0].mxu0
  %v801 = vpop.f32.mrb[0].mxu0
  %v802 = vadd.f32 0.0, %v801
  %v803 = vpop.f32.mrb[0].mxu0
  %804 = vdwg.mxu0
  %s805 = scalar_lea.vmem %s5, 64
  %v806 = vld [vmem:[%s805] sm:$0xf]
  %v807 = vld [vmem:[%s805 + $0x4] sm:$0xf]
  %v808 = vld [vmem:[%s805 + $0x8] sm:$0xf]
  %v809 = vld [vmem:[%s805 + $0xc] sm:$0xf]
  %v810 = vld [vmem:[%s805 + $0x10] sm:$0xf]
  %v811 = vld [vmem:[%s805 + $0x14] sm:$0xf]
  %v812 = vld [vmem:[%s805 + $0x18] sm:$0xf]
  %v813 = vld [vmem:[%s805 + $0x1c] sm:$0xf]
  %v822 = vunpack.c.l.b16 %v806
  %v823 = vunpack.c.l.b16 %v807
  %v824 = vunpack.c.l.b16 %v808
  %v825 = vunpack.c.l.b16 %v809
  %v826 = vunpack.c.l.b16 %v810
  %v827 = vunpack.c.l.b16 %v811
  %v828 = vunpack.c.l.b16 %v812
  %v829 = vunpack.c.l.b16 %v813
  %v830 = vpack.c.b16 %v823, %v822
  %v831 = vpack.c.b16 %v825, %v824
  %v832 = vpack.c.b16 %v827, %v826
  %v833 = vpack.c.b16 %v829, %v828
  %834 = vrot.lane.b32.xlu0 %v671, 64
  %v835 = vpop.permute.xlu0 %834
  %836 = vrot.lane.b32.xlu0 %v672, 64
  %v837 = vpop.permute.xlu0 %836
  %838 = vrot.lane.b32.xlu0 %v673, 64
  %v839 = vpop.permute.xlu0 %838
  %840 = vrot.lane.b32.xlu0 %v674, 64
  %v841 = vpop.permute.xlu0 %840
  %v847 = vsel %vm407, %v830, 0
  %v850 = vsel %vm407, %v831, 0
  %v853 = vsel %vm407, %v832, 0
  %v856 = vsel %vm407, %v833, 0
  %858 = vmatprep.subr.bf16.mxu0 0
  %859 = vmatpush1.bf16.msra.mxu0 %v835
  %860 = vmatprep.subr.bf16.mxu0 0
  %861 = vmatpush1.bf16.msra.mxu0 %v837
  %862 = vmatprep.subr.bf16.mxu0 0
  %863 = vmatpush1.bf16.msra.mxu0 %v839
  %864 = vmatprep.subr.bf16.mxu0 0
  %865 = vmatpush1.bf16.msra.mxu0 %v841
  %866 = vmatprep.subr.bf16.mxu0 0
  %867 = vmatpush1.bf16.msra.mxu0 0
  %868 = vmatprep.subr.bf16.mxu0 0
  %869 = vmatpush1.bf16.msra.mxu0 0
  %870 = vmatprep.subr.bf16.mxu0 0
  %871 = vmatpush1.bf16.msra.mxu0 0
  %872 = vmatprep.subr.bf16.mxu0 0
  %873 = vmatpush1.bf16.msra.mxu0 0
  %874 = vmatprep.subr.bf16.mxu0 0
  %875 = vmatpush1.bf16.msra.mxu0 0
  %876 = vmatprep.subr.bf16.mxu0 0
  %877 = vmatpush1.bf16.msra.mxu0 0
  %878 = vmatprep.subr.bf16.mxu0 0
  %879 = vmatpush1.bf16.msra.mxu0 0
  %880 = vmatprep.subr.bf16.mxu0 0
  %881 = vmatpush1.bf16.msra.mxu0 0
  %882 = vmatprep.subr.bf16.mxu0 0
  %883 = vmatpush1.bf16.msra.mxu0 0
  %884 = vmatprep.subr.bf16.mxu0 0
  %885 = vmatpush1.bf16.msra.mxu0 0
  %886 = vmatprep.subr.bf16.mxu0 0
  %887 = vmatpush1.bf16.msra.mxu0 0
  %888 = vmatprep.subr.bf16.mxu0 0
  %889 = vmatpush1.bf16.msra.mxu0 0
  %890 = vmatprep.mubr.bf16.mxu0 0
  %891 = vmatmul.mubr.bf16.gmra.mrb[0].mxu0 %v847
  %v892 = vpop.f32.mrb[0].mxu0
  %v893 = vadd.f32 0.0, %v892
  %v894 = vpop.f32.mrb[0].mxu0
  %v895 = vpop.f32.mrb[0].mxu0
  %v896 = vadd.f32 0.0, %v895
  %v897 = vpop.f32.mrb[0].mxu0
  %898 = vmatprep.mubr.bf16.mxu0 0
  %899 = vmatmul.mubr.bf16.gmra.mrb[0].mxu0 %v850
  %v900 = vpop.f32.mrb[0].mxu0
  %v901 = vadd.f32 0.0, %v900
  %v902 = vpop.f32.mrb[0].mxu0
  %v903 = vpop.f32.mrb[0].mxu0
  %v904 = vadd.f32 0.0, %v903
  %v905 = vpop.f32.mrb[0].mxu0
  %906 = vmatprep.mubr.bf16.mxu0 0
  %907 = vmatmul.mubr.bf16.gmra.mrb[0].mxu0 %v853
  %v908 = vpop.f32.mrb[0].mxu0
  %v909 = vadd.f32 0.0, %v908
  %v910 = vpop.f32.mrb[0].mxu0
  %v911 = vpop.f32.mrb[0].mxu0
  %v912 = vadd.f32 0.0, %v911
  %v913 = vpop.f32.mrb[0].mxu0
  %914 = vmatprep.mubr.bf16.mxu0 0
  %915 = vmatmul.mubr.bf16.gmra.mrb[0].mxu0 %v856
  %v916 = vpop.f32.mrb[0].mxu0
  %v917 = vadd.f32 0.0, %v916
  %v918 = vpop.f32.mrb[0].mxu0
  %v919 = vpop.f32.mrb[0].mxu0
  %v920 = vadd.f32 0.0, %v919
  %v921 = vpop.f32.mrb[0].mxu0
  %922 = vdwg.mxu0
  %v931 = vunpack.c.l.b16 %v675
  %v932 = vunpack.c.l.b16 %v676
  %v933 = vunpack.c.l.b16 %v677
  %v934 = vunpack.c.l.b16 %v678
  %v935 = vunpack.c.l.b16 %v679
  %v936 = vunpack.c.l.b16 %v680
  %v937 = vunpack.c.l.b16 %v681
  %v938 = vunpack.c.l.b16 %v682
  %v939 = vpack.c.b16 %v932, %v931
  %v940 = vpack.c.b16 %v934, %v933
  %v941 = vpack.c.b16 %v936, %v935
  %v942 = vpack.c.b16 %v938, %v937
  %v944 = vsel %vm407, %v939, 0
  %v947 = vsel %vm407, %v940, 0
  %v950 = vsel %vm407, %v941, 0
  %v953 = vsel %vm407, %v942, 0
  %955 = vmatprep.subr.bf16.mxu0 0
  %956 = vmatpush1.bf16.msra.mxu0 %v671
  %957 = vmatprep.subr.bf16.mxu0 0
  %958 = vmatpush1.bf16.msra.mxu0 %v672
  %959 = vmatprep.subr.bf16.mxu0 0
  %960 = vmatpush1.bf16.msra.mxu0 %v673
  %961 = vmatprep.subr.bf16.mxu0 0
  %962 = vmatpush1.bf16.msra.mxu0 %v674
  %963 = vmatprep.subr.bf16.mxu0 0
  %964 = vmatpush1.bf16.msra.mxu0 0
  %965 = vmatprep.subr.bf16.mxu0 0
  %966 = vmatpush1.bf16.msra.mxu0 0
  %967 = vmatprep.subr.bf16.mxu0 0
  %968 = vmatpush1.bf16.msra.mxu0 0
  %969 = vmatprep.subr.bf16.mxu0 0
  %970 = vmatpush1.bf16.msra.mxu0 0
  %971 = vmatprep.subr.bf16.mxu0 0
  %972 = vmatpush1.bf16.msra.mxu0 0
  %973 = vmatprep.subr.bf16.mxu0 0
  %974 = vmatpush1.bf16.msra.mxu0 0
  %975 = vmatprep.subr.bf16.mxu0 0
  %976 = vmatpush1.bf16.msra.mxu0 0
  %977 = vmatprep.subr.bf16.mxu0 0
  %978 = vmatpush1.bf16.msra.mxu0 0
  %979 = vmatprep.subr.bf16.mxu0 0
  %980 = vmatpush1.bf16.msra.mxu0 0
  %981 = vmatprep.subr.bf16.mxu0 0
  %982 = vmatpush1.bf16.msra.mxu0 0
  %983 = vmatprep.subr.bf16.mxu0 0
  %984 = vmatpush1.bf16.msra.mxu0 0
  %985 = vmatprep.subr.bf16.mxu0 0
  %986 = vmatpush1.bf16.msra.mxu0 0
  %987 = vmatprep.mubr.bf16.mxu0 0
  %988 = vmatmul.mubr.bf16.gmra.mrb[0].mxu0 %v944
  %v989 = vpop.f32.mrb[0].mxu0
  %v990 = vadd.f32 %v775, %v989
  %v991 = vpop.f32.mrb[0].mxu0
  %v992 = vpop.f32.mrb[0].mxu0
  %v993 = vadd.f32 %v778, %v992
  %v994 = vpop.f32.mrb[0].mxu0
  %995 = vmatprep.mubr.bf16.mxu0 0
  %996 = vmatmul.mubr.bf16.gmra.mrb[0].mxu0 %v947
  %v997 = vpop.f32.mrb[0].mxu0
  %v998 = vadd.f32 %v783, %v997
  %v999 = vpop.f32.mrb[0].mxu0
  %v1000 = vpop.f32.mrb[0].mxu0
  %v1001 = vadd.f32 %v786, %v1000
  %v1002 = vpop.f32.mrb[0].mxu0
  %1003 = vmatprep.mubr.bf16.mxu0 0
  %1004 = vmatmul.mubr.bf16.gmra.mrb[0].mxu0 %v950
  %v1005 = vpop.f32.mrb[0].mxu0
  %v1006 = vadd.f32 %v791, %v1005
  %v1007 = vpop.f32.mrb[0].mxu0
  %v1008 = vpop.f32.mrb[0].mxu0
  %v1009 = vadd.f32 %v794, %v1008
  %v1010 = vpop.f32.mrb[0].mxu0
  %1011 = vmatprep.mubr.bf16.mxu0 0
  %1012 = vmatmul.mubr.bf16.gmra.mrb[0].mxu0 %v953
  %v1013 = vpop.f32.mrb[0].mxu0
  %v1014 = vadd.f32 %v799, %v1013
  %v1015 = vpop.f32.mrb[0].mxu0
  %v1016 = vpop.f32.mrb[0].mxu0
  %v1017 = vadd.f32 %v802, %v1016
  %v1018 = vpop.f32.mrb[0].mxu0
  %1019 = vdwg.mxu0
  %v1020 = vadd.f32 %v990, %v893
  %v1021 = vadd.f32 %v993, %v896
  %v1022 = vadd.f32 %v998, %v901
  %v1023 = vadd.f32 %v1001, %v904
  %v1024 = vadd.f32 %v1006, %v909
  %v1025 = vadd.f32 %v1009, %v912
  %v1026 = vadd.f32 %v1014, %v917
  %v1027 = vadd.f32 %v1017, %v920
  %v1028 = vmax.f32 %v1020, 0.0
  %v1029 = vmax.f32 %v1021, 0.0
  %v1030 = vmax.f32 %v1022, 0.0
  %v1031 = vmax.f32 %v1023, 0.0
  %v1032 = vmax.f32 %v1024, 0.0
  %v1033 = vmax.f32 %v1025, 0.0
  %v1034 = vmax.f32 %v1026, 0.0
  %v1035 = vmax.f32 %v1027, 0.0
  %v1036 = vpack.c.bf16 %v1029, %v1028
  %v1037 = vpack.c.bf16 %v1031, %v1030
  %v1038 = vpack.c.bf16 %v1033, %v1032
  %v1039 = vpack.c.bf16 %v1035, %v1034
  %v1040 = vld [vmem:[%s7] sm:$0xf]
  %v1041 = vld [vmem:[%s7 + $0x4] sm:$0xf]
  %v1042 = vld [vmem:[%s7 + $0x8] sm:$0xf]
  %v1043 = vld [vmem:[%s7 + $0xc] sm:$0xf]
  %v1048 = vunpack.c.l.b16 %v1040
  %v1049 = vunpack.c.l.b16 %v1041
  %v1050 = vunpack.c.l.b16 %v1042
  %v1051 = vunpack.c.l.b16 %v1043
  %v1052 = vpack.c.b16 %v1049, %v1048
  %v1053 = vpack.c.b16 %v1051, %v1050
  %v1057 = vsel %vm317, %v1036, 0
  %v1060 = vsel %vm317, %v1037, 0
  %v1063 = vsel %vm317, %v1038, 0
  %v1066 = vsel %vm317, %v1039, 0
  %1068 = vmatprep.subr.bf16.mxu0 0
  %1069 = vmatpush1.bf16.msra.mxu0 %v1052
  %1070 = vmatprep.subr.bf16.mxu0 0
  %1071 = vmatpush1.bf16.msra.mxu0 %v1053
  %1072 = vmatprep.subr.bf16.mxu0 0
  %1073 = vmatpush1.bf16.msra.mxu0 0
  %1074 = vmatprep.subr.bf16.mxu0 0
  %1075 = vmatpush1.bf16.msra.mxu0 0
  %1076 = vmatprep.subr.bf16.mxu0 0
  %1077 = vmatpush1.bf16.msra.mxu0 0
  %1078 = vmatprep.subr.bf16.mxu0 0
  %1079 = vmatpush1.bf16.msra.mxu0 0
  %1080 = vmatprep.subr.bf16.mxu0 0
  %1081 = vmatpush1.bf16.msra.mxu0 0
  %1082 = vmatprep.subr.bf16.mxu0 0
  %1083 = vmatpush1.bf16.msra.mxu0 0
  %1084 = vmatprep.subr.bf16.mxu0 0
  %1085 = vmatpush1.bf16.msra.mxu0 0
  %1086 = vmatprep.subr.bf16.mxu0 0
  %1087 = vmatpush1.bf16.msra.mxu0 0
  %1088 = vmatprep.subr.bf16.mxu0 0
  %1089 = vmatpush1.bf16.msra.mxu0 0
  %1090 = vmatprep.subr.bf16.mxu0 0
  %1091 = vmatpush1.bf16.msra.mxu0 0
  %1092 = vmatprep.subr.bf16.mxu0 0
  %1093 = vmatpush1.bf16.msra.mxu0 0
  %1094 = vmatprep.subr.bf16.mxu0 0
  %1095 = vmatpush1.bf16.msra.mxu0 0
  %1096 = vmatprep.subr.bf16.mxu0 0
  %1097 = vmatpush1.bf16.msra.mxu0 0
  %1098 = vmatprep.subr.bf16.mxu0 0
  %1099 = vmatpush1.bf16.msra.mxu0 0
  %1100 = vmatprep.mubr.bf16.mxu0 0
  %1101 = vmatmul.mubr.bf16.gmra.mrb[0].mxu0 %v1057
  %v1102 = vpop.f32.mrb[0].mxu0
  %v1103 = vadd.f32 0.0, %v1102
  %v1104 = vpop.f32.mrb[0].mxu0
  %v1105 = vpop.f32.mrb[0].mxu0
  %v1106 = vadd.f32 0.0, %v1105
  %v1107 = vpop.f32.mrb[0].mxu0
  %1108 = vmatprep.mubr.bf16.mxu0 0
  %1109 = vmatmul.mubr.bf16.gmra.mrb[0].mxu0 %v1060
  %v1110 = vpop.f32.mrb[0].mxu0
  %v1111 = vadd.f32 0.0, %v1110
  %v1112 = vpop.f32.mrb[0].mxu0
  %v1113 = vpop.f32.mrb[0].mxu0
  %v1114 = vadd.f32 0.0, %v1113
  %v1115 = vpop.f32.mrb[0].mxu0
  %1116 = vmatprep.mubr.bf16.mxu0 0
  %1117 = vmatmul.mubr.bf16.gmra.mrb[0].mxu0 %v1063
  %v1118 = vpop.f32.mrb[0].mxu0
  %v1119 = vadd.f32 0.0, %v1118
  %v1120 = vpop.f32.mrb[0].mxu0
  %v1121 = vpop.f32.mrb[0].mxu0
  %v1122 = vadd.f32 0.0, %v1121
  %v1123 = vpop.f32.mrb[0].mxu0
  %1124 = vmatprep.mubr.bf16.mxu0 0
  %1125 = vmatmul.mubr.bf16.gmra.mrb[0].mxu0 %v1066
  %v1126 = vpop.f32.mrb[0].mxu0
  %v1127 = vadd.f32 0.0, %v1126
  %v1128 = vpop.f32.mrb[0].mxu0
  %v1129 = vpop.f32.mrb[0].mxu0
  %v1130 = vadd.f32 0.0, %v1129
  %v1131 = vpop.f32.mrb[0].mxu0
  %1132 = vdwg.mxu0
  %v1133 = vpack.c.bf16 %v1106, %v1103
  %v1134 = vpack.c.bf16 %v1114, %v1111
  %v1135 = vpack.c.bf16 %v1122, %v1119
  %v1136 = vpack.c.bf16 %v1130, %v1127
  %1141 = vrot.lane.b32.xlu0 %v1133, 120
  %v1142 = vpop.permute.xlu0 %1141
  %1143 = vrot.lane.b32.xlu0 %v1134, 120
  %v1144 = vpop.permute.xlu0 %1143
  %1145 = vrot.lane.b32.xlu0 %v1135, 120
  %v1146 = vpop.permute.xlu0 %1145
  %1147 = vrot.lane.b32.xlu0 %v1136, 120
  %v1148 = vpop.permute.xlu0 %1147
  %1153 = vmatprep.subr.bf16.mxu0 0
  %1154 = vmatpush1.bf16.msra.mxu0 %v1142
  %1155 = vmatprep.subr.bf16.mxu0 0
  %1156 = vmatpush1.bf16.msra.mxu0 %v1144
  %1157 = vmatprep.subr.bf16.mxu0 0
  %1158 = vmatpush1.bf16.msra.mxu0 %v1146
  %1159 = vmatprep.subr.bf16.mxu0 0
  %1160 = vmatpush1.bf16.msra.mxu0 %v1148
  %1161 = vmatprep.subr.bf16.mxu0 0
  %1162 = vmatpush1.bf16.msra.mxu0 0
  %1163 = vmatprep.subr.bf16.mxu0 0
  %1164 = vmatpush1.bf16.msra.mxu0 0
  %1165 = vmatprep.subr.bf16.mxu0 0
  %1166 = vmatpush1.bf16.msra.mxu0 0
  %1167 = vmatprep.subr.bf16.mxu0 0
  %1168 = vmatpush1.bf16.msra.mxu0 0
  %1169 = vmatprep.subr.bf16.mxu0 0
  %1170 = vmatpush1.bf16.msra.mxu0 0
  %1171 = vmatprep.subr.bf16.mxu0 0
  %1172 = vmatpush1.bf16.msra.mxu0 0
  %1173 = vmatprep.subr.bf16.mxu0 0
  %1174 = vmatpush1.bf16.msra.mxu0 0
  %1175 = vmatprep.subr.bf16.mxu0 0
  %1176 = vmatpush1.bf16.msra.mxu0 0
  %1177 = vmatprep.subr.bf16.mxu0 0
  %1178 = vmatpush1.bf16.msra.mxu0 0
  %1179 = vmatprep.subr.bf16.mxu0 0
  %1180 = vmatpush1.bf16.msra.mxu0 0
  %1181 = vmatprep.subr.bf16.mxu0 0
  %1182 = vmatpush1.bf16.msra.mxu0 0
  %1183 = vmatprep.subr.bf16.mxu0 0
  %1184 = vmatpush1.bf16.msra.mxu0 0
  %1185 = vmatprep.mubr.bf16.mxu0 0
  %1186 = vmatmul.mubr.bf16.gmra.mrb[0].mxu0 %v729
  %v1187 = vpop.f32.mrb[0].mxu0
  %v1188 = vadd.f32 0.0, %v1187
  %v1189 = vpop.f32.mrb[0].mxu0
  %v1190 = vpop.f32.mrb[0].mxu0
  %v1191 = vadd.f32 0.0, %v1190
  %v1192 = vpop.f32.mrb[0].mxu0
  %1193 = vmatprep.mubr.bf16.mxu0 0
  %1194 = vmatmul.mubr.bf16.gmra.mrb[0].mxu0 %v732
  %v1195 = vpop.f32.mrb[0].mxu0
  %v1196 = vadd.f32 0.0, %v1195
  %v1197 = vpop.f32.mrb[0].mxu0
  %v1198 = vpop.f32.mrb[0].mxu0
  %v1199 = vadd.f32 0.0, %v1198
  %v1200 = vpop.f32.mrb[0].mxu0
  %1201 = vmatprep.mubr.bf16.mxu0 0
  %1202 = vmatmul.mubr.bf16.gmra.mrb[0].mxu0 %v735
  %v1203 = vpop.f32.mrb[0].mxu0
  %v1204 = vadd.f32 0.0, %v1203
  %v1205 = vpop.f32.mrb[0].mxu0
  %v1206 = vpop.f32.mrb[0].mxu0
  %v1207 = vadd.f32 0.0, %v1206
  %v1208 = vpop.f32.mrb[0].mxu0
  %1209 = vmatprep.mubr.bf16.mxu0 0
  %1210 = vmatmul.mubr.bf16.gmra.mrb[0].mxu0 %v738
  %v1211 = vpop.f32.mrb[0].mxu0
  %v1212 = vadd.f32 0.0, %v1211
  %v1213 = vpop.f32.mrb[0].mxu0
  %v1214 = vpop.f32.mrb[0].mxu0
  %v1215 = vadd.f32 0.0, %v1214
  %v1216 = vpop.f32.mrb[0].mxu0
  %1217 = vdwg.mxu0
  %1218 = vrot.lane.b32.xlu0 %v1133, 112
  %v1219 = vpop.permute.xlu0 %1218
  %1220 = vrot.lane.b32.xlu0 %v1134, 112
  %v1221 = vpop.permute.xlu0 %1220
  %1222 = vrot.lane.b32.xlu0 %v1135, 112
  %v1223 = vpop.permute.xlu0 %1222
  %1224 = vrot.lane.b32.xlu0 %v1136, 112
  %v1225 = vpop.permute.xlu0 %1224
  %1230 = vmatprep.subr.bf16.mxu0 0
  %1231 = vmatpush1.bf16.msra.mxu0 %v1219
  %1232 = vmatprep.subr.bf16.mxu0 0
  %1233 = vmatpush1.bf16.msra.mxu0 %v1221
  %1234 = vmatprep.subr.bf16.mxu0 0
  %1235 = vmatpush1.bf16.msra.mxu0 %v1223
  %1236 = vmatprep.subr.bf16.mxu0 0
  %1237 = vmatpush1.bf16.msra.mxu0 %v1225
  %1238 = vmatprep.subr.bf16.mxu0 0
  %1239 = vmatpush1.bf16.msra.mxu0 0
  %1240 = vmatprep.subr.bf16.mxu0 0
  %1241 = vmatpush1.bf16.msra.mxu0 0
  %1242 = vmatprep.subr.bf16.mxu0 0
  %1243 = vmatpush1.bf16.msra.mxu0 0
  %1244 = vmatprep.subr.bf16.mxu0 0
  %1245 = vmatpush1.bf16.msra.mxu0 0
  %1246 = vmatprep.subr.bf16.mxu0 0
  %1247 = vmatpush1.bf16.msra.mxu0 0
  %1248 = vmatprep.subr.bf16.mxu0 0
  %1249 = vmatpush1.bf16.msra.mxu0 0
  %1250 = vmatprep.subr.bf16.mxu0 0
  %1251 = vmatpush1.bf16.msra.mxu0 0
  %1252 = vmatprep.subr.bf16.mxu0 0
  %1253 = vmatpush1.bf16.msra.mxu0 0
  %1254 = vmatprep.subr.bf16.mxu0 0
  %1255 = vmatpush1.bf16.msra.mxu0 0
  %1256 = vmatprep.subr.bf16.mxu0 0
  %1257 = vmatpush1.bf16.msra.mxu0 0
  %1258 = vmatprep.subr.bf16.mxu0 0
  %1259 = vmatpush1.bf16.msra.mxu0 0
  %1260 = vmatprep.subr.bf16.mxu0 0
  %1261 = vmatpush1.bf16.msra.mxu0 0
  %1262 = vmatprep.mubr.bf16.mxu0 0
  %1263 = vmatmul.mubr.bf16.gmra.mrb[0].mxu0 %v847
  %v1264 = vpop.f32.mrb[0].mxu0
  %v1265 = vadd.f32 0.0, %v1264
  %v1266 = vpop.f32.mrb[0].mxu0
  %v1267 = vpop.f32.mrb[0].mxu0
  %v1268 = vadd.f32 0.0, %v1267
  %v1269 = vpop.f32.mrb[0].mxu0
  %1270 = vmatprep.mubr.bf16.mxu0 0
  %1271 = vmatmul.mubr.bf16.gmra.mrb[0].mxu0 %v850
  %v1272 = vpop.f32.mrb[0].mxu0
  %v1273 = vadd.f32 0.0, %v1272
  %v1274 = vpop.f32.mrb[0].mxu0
  %v1275 = vpop.f32.mrb[0].mxu0
  %v1276 = vadd.f32 0.0, %v1275
  %v1277 = vpop.f32.mrb[0].mxu0
  %1278 = vmatprep.mubr.bf16.mxu0 0
  %1279 = vmatmul.mubr.bf16.gmra.mrb[0].mxu0 %v853
  %v1280 = vpop.f32.mrb[0].mxu0
  %v1281 = vadd.f32 0.0, %v1280
  %v1282 = vpop.f32.mrb[0].mxu0
  %v1283 = vpop.f32.mrb[0].mxu0
  %v1284 = vadd.f32 0.0, %v1283
  %v1285 = vpop.f32.mrb[0].mxu0
  %1286 = vmatprep.mubr.bf16.mxu0 0
  %1287 = vmatmul.mubr.bf16.gmra.mrb[0].mxu0 %v856
  %v1288 = vpop.f32.mrb[0].mxu0
  %v1289 = vadd.f32 0.0, %v1288
  %v1290 = vpop.f32.mrb[0].mxu0
  %v1291 = vpop.f32.mrb[0].mxu0
  %v1292 = vadd.f32 0.0, %v1291
  %v1293 = vpop.f32.mrb[0].mxu0
  %1294 = vdwg.mxu0
  %1295 = vmatprep.subr.bf16.mxu0 0
  %1296 = vmatpush1.bf16.msra.mxu0 %v1133
  %1297 = vmatprep.subr.bf16.mxu0 0
  %1298 = vmatpush1.bf16.msra.mxu0 %v1134
  %1299 = vmatprep.subr.bf16.mxu0 0
  %1300 = vmatpush1.bf16.msra.mxu0 %v1135
  %1301 = vmatprep.subr.bf16.mxu0 0
  %1302 = vmatpush1.bf16.msra.mxu0 %v1136
  %1303 = vmatprep.subr.bf16.mxu0 0
  %1304 = vmatpush1.bf16.msra.mxu0 0
  %1305 = vmatprep.subr.bf16.mxu0 0
  %1306 = vmatpush1.bf16.msra.mxu0 0
  %1307 = vmatprep.subr.bf16.mxu0 0
  %1308 = vmatpush1.bf16.msra.mxu0 0
  %1309 = vmatprep.subr.bf16.mxu0 0
  %1310 = vmatpush1.bf16.msra.mxu0 0
  %1311 = vmatprep.subr.bf16.mxu0 0
  %1312 = vmatpush1.bf16.msra.mxu0 0
  %1313 = vmatprep.subr.bf16.mxu0 0
  %1314 = vmatpush1.bf16.msra.mxu0 0
  %1315 = vmatprep.subr.bf16.mxu0 0
  %1316 = vmatpush1.bf16.msra.mxu0 0
  %1317 = vmatprep.subr.bf16.mxu0 0
  %1318 = vmatpush1.bf16.msra.mxu0 0
  %1319 = vmatprep.subr.bf16.mxu0 0
  %1320 = vmatpush1.bf16.msra.mxu0 0
  %1321 = vmatprep.subr.bf16.mxu0 0
  %1322 = vmatpush1.bf16.msra.mxu0 0
  %1323 = vmatprep.subr.bf16.mxu0 0
  %1324 = vmatpush1.bf16.msra.mxu0 0
  %1325 = vmatprep.subr.bf16.mxu0 0
  %1326 = vmatpush1.bf16.msra.mxu0 0
  %1327 = vmatprep.mubr.bf16.mxu0 0
  %1328 = vmatmul.mubr.bf16.gmra.mrb[0].mxu0 %v944
  %v1329 = vpop.f32.mrb[0].mxu0
  %v1330 = vadd.f32 %v1188, %v1329
  %v1331 = vpop.f32.mrb[0].mxu0
  %v1332 = vpop.f32.mrb[0].mxu0
  %v1333 = vadd.f32 %v1191, %v1332
  %v1334 = vpop.f32.mrb[0].mxu0
  %1335 = vmatprep.mubr.bf16.mxu0 0
  %1336 = vmatmul.mubr.bf16.gmra.mrb[0].mxu0 %v947
  %v1337 = vpop.f32.mrb[0].mxu0
  %v1338 = vadd.f32 %v1196, %v1337
  %v1339 = vpop.f32.mrb[0].mxu0
  %v1340 = vpop.f32.mrb[0].mxu0
  %v1341 = vadd.f32 %v1199, %v1340
  %v1342 = vpop.f32.mrb[0].mxu0
  %1343 = vmatprep.mubr.bf16.mxu0 0
  %1344 = vmatmul.mubr.bf16.gmra.mrb[0].mxu0 %v950
  %v1345 = vpop.f32.mrb[0].mxu0
  %v1346 = vadd.f32 %v1204, %v1345
  %v1347 = vpop.f32.mrb[0].mxu0
  %v1348 = vpop.f32.mrb[0].mxu0
  %v1349 = vadd.f32 %v1207, %v1348
  %v1350 = vpop.f32.mrb[0].mxu0
  %1351 = vmatprep.mubr.bf16.mxu0 0
  %1352 = vmatmul.mubr.bf16.gmra.mrb[0].mxu0 %v953
  %v1353 = vpop.f32.mrb[0].mxu0
  %v1354 = vadd.f32 %v1212, %v1353
  %v1355 = vpop.f32.mrb[0].mxu0
  %v1356 = vpop.f32.mrb[0].mxu0
  %v1357 = vadd.f32 %v1215, %v1356
  %v1358 = vpop.f32.mrb[0].mxu0
  %1359 = vdwg.mxu0
  %v1360 = vadd.f32 %v1330, %v1265
  %v1361 = vadd.f32 %v1333, %v1268
  %v1362 = vadd.f32 %v1338, %v1273
  %v1363 = vadd.f32 %v1341, %v1276
  %v1364 = vadd.f32 %v1346, %v1281
  %v1365 = vadd.f32 %v1349, %v1284
  %v1366 = vadd.f32 %v1354, %v1289
  %v1367 = vadd.f32 %v1357, %v1292
  %1368 = vst.msk [vmem:[%s8] sm:$0xff] %vm73, %v1360
  %1369 = vst.msk [vmem:[%s8 + $0x8] sm:$0xff] %vm73, %v1361
  %1370 = vst.msk [vmem:[%s8 + $0x10] sm:$0xff] %vm73, %v1362
  %1371 = vst.msk [vmem:[%s8 + $0x18] sm:$0xff] %vm73, %v1363
  %1372 = vst.msk [vmem:[%s8 + $0x20] sm:$0xff] %vm73, %v1364
  %1373 = vst.msk [vmem:[%s8 + $0x28] sm:$0xff] %vm73, %v1365
  %1374 = vst.msk [vmem:[%s8 + $0x30] sm:$0xff] %vm73, %v1366
  %1375 = vst.msk [vmem:[%s8 + $0x38] sm:$0xff] %vm73, %v1367
  // Predicated region
  $region34: #{mrgcn_forward.1} parent=0 // pred_check
    _
  $region35: #{mrgcn_forward.1} parent=0 // pred_check_branch
    %1377 = sbr.rel (0) target = $region37
  $region36: #{mrgcn_forward.1} parent=0 // pred_region
    _
  $region37: #{mrgcn_forward.1} parent=0 // pred_fallthru
    _
  // Predicated region
  $region38: #{mrgcn_forward.1} parent=0 // pred_check
    _
  $region39: #{mrgcn_forward.1} parent=0 // pred_check_branch
    %1379 = sbr.rel (0) target = $region41
  $region40: #{mrgcn_forward.1} parent=0 // pred_region
    _
  $region41: #{mrgcn_forward.1} parent=0 // pred_fallthru
    _

</llo_original>
